<compile_context>
chip_gen: v7x
topology: tpu7x:2x2x1
jax: 0.10.0
libtpu: 0.0.40
codegen_flags: <defaults>
</compile_context>

<pallas_src>
import functools

import numpy as np
import jax
import jax.numpy as jnp
from jax.experimental import pallas as pl
from jax.experimental.pallas import tpu as pltpu


def _ffn_kernel(x_ref, w1_ref, b1_ref, w2_ref, b2_ref, g_ref, beta_ref, o_ref,
                *, eps, inv_nm1):
    x = x_ref[...]                                              # (TM, D) f32

    # Position-wise MLP (Conv1d with kernel_size=1 == per-token linear).
    h = jnp.dot(x, w1_ref[...], preferred_element_type=jnp.float32) + b1_ref[...]
    h = jnp.maximum(h, 0.0)                                     # ReLU
    y = jnp.dot(h, w2_ref[...], preferred_element_type=jnp.float32) + b2_ref[...]

    # Residual + LayerNormalization (torch: unbiased std, eps added to std).
    z = x + y
    mean = jnp.mean(z, axis=-1, keepdims=True)
    d = z - mean
    var = jnp.sum(d * d, axis=-1, keepdims=True) * inv_nm1      # ddof = 1
    std = jnp.sqrt(var)
    ln = d / (std + eps)
    o_ref[...] = ln * g_ref[...] + beta_ref[...]


def poswise_feed_forward(inputs, w1, b1, w2, b2, gamma, beta,
                         *, eps=1e-3, block_m=128):
    """inputs: (B, S, d_model) f32.
    w1: (d_model, d_ff), b1: (d_ff,)   -- conv1 (kernel_size=1) as a linear
    w2: (d_ff, d_model), b2: (d_model,) -- conv2 (kernel_size=1) as a linear
    gamma, beta: (d_model,) layer-norm affine params.
    Returns (B, S, d_model) f32.
    """
    B, S, D = inputs.shape
    d_ff = w1.shape[1]

    M = B * S
    x2 = inputs.reshape(M, D)

    # Row-tile size: multiple of 8, capped at block_m; pad rows if needed.
    tm = max(8, (min(block_m, M) // 8) * 8)
    Mp = pl.cdiv(M, tm) * tm
    if Mp != M:
        x2 = jnp.pad(x2, ((0, Mp - M), (0, 0)))

    # Present 1-D params as (1, N) so broadcasts are trivially lane-aligned.
    b1_2 = b1.reshape(1, d_ff)
    b2_2 = b2.reshape(1, D)
    g_2 = gamma.reshape(1, D)
    be_2 = beta.reshape(1, D)

    kernel = functools.partial(_ffn_kernel, eps=float(eps),
                               inv_nm1=1.0 / float(D - 1))

    out = pl.pallas_call(
        kernel,
        out_shape=jax.ShapeDtypeStruct((Mp, D), jnp.float32),
        grid=(Mp // tm,),
        in_specs=[
            pl.BlockSpec((tm, D), lambda i: (i, 0)),        # x row tile
            pl.BlockSpec((D, d_ff), lambda i: (0, 0)),      # W1 (resident)
            pl.BlockSpec((1, d_ff), lambda i: (0, 0)),      # b1 (resident)
            pl.BlockSpec((d_ff, D), lambda i: (0, 0)),      # W2 (resident)
            pl.BlockSpec((1, D), lambda i: (0, 0)),         # b2 (resident)
            pl.BlockSpec((1, D), lambda i: (0, 0)),         # gamma (resident)
            pl.BlockSpec((1, D), lambda i: (0, 0)),         # beta (resident)
        ],
        out_specs=pl.BlockSpec((tm, D), lambda i: (i, 0)),
        compiler_params=pltpu.CompilerParams(
            dimension_semantics=("parallel",)),
    )(x2, w1, b1_2, w2, b2_2, g_2, be_2)

    return out[:M].reshape(B, S, D)


def _reference(inputs, w1, b1, w2, b2, gamma, beta, eps=1e-3):
    h = jnp.maximum(jnp.einsum('bsd,df->bsf', inputs, w1) + b1, 0.0)
    y = jnp.einsum('bsf,fd->bsd', h, w2) + b2
    z = inputs + y
    mean = jnp.mean(z, axis=-1, keepdims=True)
    std = jnp.std(z, axis=-1, keepdims=True, ddof=1)   # torch.std: unbiased
    ln = (z - mean) / (std + eps)
    return gamma * ln + beta


if __name__ == "__main__":
    # Small shapes consistent with the module's forward.
    B, S, D, d_ff = 2, 8, 32, 64

    key = jax.random.PRNGKey(0)
    kx, kw1, kb1, kw2, kb2, kg, kb = jax.random.split(key, 7)

    x = jax.random.normal(kx, (B, S, D), dtype=jnp.float32)

    # Conv1d(kernel_size=1) weights expressed as (in, out) linears.
    w1 = jax.random.normal(kw1, (D, d_ff), dtype=jnp.float32) * (1.0 / np.sqrt(D))
    b1 = jax.random.normal(kb1, (d_ff,), dtype=jnp.float32) * 0.1
    w2 = jax.random.normal(kw2, (d_ff, D), dtype=jnp.float32) * (1.0 / np.sqrt(d_ff))
    b2 = jax.random.normal(kb2, (D,), dtype=jnp.float32) * 0.1

    # LayerNormalization params (module inits ones/zeros; perturb to test affine path).
    gamma = 1.0 + 0.1 * jax.random.normal(kg, (D,), dtype=jnp.float32)
    beta = 0.1 * jax.random.normal(kb, (D,), dtype=jnp.float32)

    out = poswise_feed_forward(x, w1, b1, w2, b2, gamma, beta)
    jax.block_until_ready(out)

    ref = _reference(x, w1, b1, w2, b2, gamma, beta)
    np.testing.assert_allclose(np.asarray(out), np.asarray(ref),
                               rtol=1e-4, atol=1e-5)

    print("KERNEL_OK")
</pallas_src>

<mosaic_0001>
module attributes {stable_mosaic.version = 11 : i64} {
  func.func @_ffn_kernel(%arg0: i32, %arg1: memref<16x32xf32, #tpu.memory_space<vmem>>, %arg2: memref<32x64xf32, #tpu.memory_space<vmem>>, %arg3: memref<1x64xf32, #tpu.memory_space<vmem>>, %arg4: memref<64x32xf32, #tpu.memory_space<vmem>>, %arg5: memref<1x32xf32, #tpu.memory_space<vmem>>, %arg6: memref<1x32xf32, #tpu.memory_space<vmem>>, %arg7: memref<1x32xf32, #tpu.memory_space<vmem>>, %arg8: memref<16x32xf32, #tpu.memory_space<vmem>>) attributes {dimension_semantics = [#tpu.dimension_semantics<parallel>], iteration_bounds = array<i64: 1>, scalar_prefetch = 0 : i64, scratch_operands = 0 : i64, tpu.core_type = #tpu.core_type<tc>, window_params = [{transform_indices = @transform_0, window_bounds = array<i64: 16, 32>}, {pipeline_mode = #tpu.pipeline_mode<synchronous>, transform_indices = @transform_1, window_bounds = array<i64: 32, 64>}, {pipeline_mode = #tpu.pipeline_mode<synchronous>, transform_indices = @transform_2, window_bounds = array<i64: 1, 64>}, {pipeline_mode = #tpu.pipeline_mode<synchronous>, transform_indices = @transform_3, window_bounds = array<i64: 64, 32>}, {pipeline_mode = #tpu.pipeline_mode<synchronous>, transform_indices = @transform_4, window_bounds = array<i64: 1, 32>}, {pipeline_mode = #tpu.pipeline_mode<synchronous>, transform_indices = @transform_5, window_bounds = array<i64: 1, 32>}, {pipeline_mode = #tpu.pipeline_mode<synchronous>, transform_indices = @transform_6, window_bounds = array<i64: 1, 32>}, {transform_indices = @transform_7, window_bounds = array<i64: 16, 32>}]} {
    %c0 = arith.constant 0 : index
    %c0_0 = arith.constant 0 : index
    %0 = vector.load %arg1[%c0, %c0_0] : memref<16x32xf32, #tpu.memory_space<vmem>>, vector<16x32xf32>
    %c0_1 = arith.constant 0 : index
    %c0_2 = arith.constant 0 : index
    %1 = vector.load %arg2[%c0_1, %c0_2] : memref<32x64xf32, #tpu.memory_space<vmem>>, vector<32x64xf32>
    %cst = arith.constant dense<0.000000e+00> : vector<16x64xf32>
    %2 = tpu.matmul %0, %1, %cst {dimension_numbers = #tpu.dot_dimension_numbers<[1], [0], [0], [1], [0, 0, 1, 1], [], []>} : vector<16x32xf32>, vector<32x64xf32>, vector<16x64xf32> -> vector<16x64xf32>
    %c0_3 = arith.constant 0 : index
    %c0_4 = arith.constant 0 : index
    %3 = vector.load %arg3[%c0_3, %c0_4] : memref<1x64xf32, #tpu.memory_space<vmem>>, vector<1x64xf32>
    %4 = vector.broadcast %3 : vector<1x64xf32> to vector<16x64xf32>
    %5 = arith.addf %2, %4 : vector<16x64xf32>
    %cst_5 = arith.constant 0.000000e+00 : f32
    %6 = vector.broadcast %cst_5 : f32 to vector<16x64xf32>
    %7 = arith.maximumf %5, %6 : vector<16x64xf32>
    %c0_6 = arith.constant 0 : index
    %c0_7 = arith.constant 0 : index
    %8 = vector.load %arg4[%c0_6, %c0_7] : memref<64x32xf32, #tpu.memory_space<vmem>>, vector<64x32xf32>
    %cst_8 = arith.constant dense<0.000000e+00> : vector<16x32xf32>
    %9 = tpu.matmul %7, %8, %cst_8 {dimension_numbers = #tpu.dot_dimension_numbers<[1], [0], [0], [1], [0, 0, 1, 1], [], []>} : vector<16x64xf32>, vector<64x32xf32>, vector<16x32xf32> -> vector<16x32xf32>
    %c0_9 = arith.constant 0 : index
    %c0_10 = arith.constant 0 : index
    %10 = vector.load %arg5[%c0_9, %c0_10] : memref<1x32xf32, #tpu.memory_space<vmem>>, vector<1x32xf32>
    %11 = vector.broadcast %10 : vector<1x32xf32> to vector<16x32xf32>
    %12 = arith.addf %9, %11 : vector<16x32xf32>
    %13 = arith.addf %0, %12 : vector<16x32xf32>
    %cst_11 = arith.constant dense<0.000000e+00> : vector<16xf32>
    %14 = vector.multi_reduction <add>, %13, %cst_11 [1] : vector<16x32xf32> to vector<16xf32>
    %15 = vector.shape_cast %14 : vector<16xf32> to vector<16x1xf32>
    %cst_12 = arith.constant 3.200000e+01 : f32
    %16 = vector.broadcast %cst_12 : f32 to vector<16x1xf32>
    %17 = arith.divf %15, %16 : vector<16x1xf32>
    %18 = vector.broadcast %17 : vector<16x1xf32> to vector<16x32xf32>
    %19 = arith.subf %13, %18 : vector<16x32xf32>
    %20 = arith.mulf %19, %19 : vector<16x32xf32>
    %cst_13 = arith.constant dense<0.000000e+00> : vector<16xf32>
    %21 = vector.multi_reduction <add>, %20, %cst_13 [1] : vector<16x32xf32> to vector<16xf32>
    %22 = vector.shape_cast %21 : vector<16xf32> to vector<16x1xf32>
    %cst_14 = arith.constant 0.0322580636 : f32
    %23 = vector.broadcast %cst_14 : f32 to vector<16x1xf32>
    %24 = arith.mulf %22, %23 : vector<16x1xf32>
    %25 = math.sqrt %24 : vector<16x1xf32>
    %cst_15 = arith.constant 1.000000e-03 : f32
    %26 = vector.broadcast %cst_15 : f32 to vector<16x1xf32>
    %27 = arith.addf %25, %26 : vector<16x1xf32>
    %28 = vector.broadcast %27 : vector<16x1xf32> to vector<16x32xf32>
    %29 = arith.divf %19, %28 : vector<16x32xf32>
    %c0_16 = arith.constant 0 : index
    %c0_17 = arith.constant 0 : index
    %30 = vector.load %arg6[%c0_16, %c0_17] : memref<1x32xf32, #tpu.memory_space<vmem>>, vector<1x32xf32>
    %31 = vector.broadcast %30 : vector<1x32xf32> to vector<16x32xf32>
    %32 = arith.mulf %29, %31 : vector<16x32xf32>
    %c0_18 = arith.constant 0 : index
    %c0_19 = arith.constant 0 : index
    %33 = vector.load %arg7[%c0_18, %c0_19] : memref<1x32xf32, #tpu.memory_space<vmem>>, vector<1x32xf32>
    %34 = vector.broadcast %33 : vector<1x32xf32> to vector<16x32xf32>
    %35 = arith.addf %32, %34 : vector<16x32xf32>
    %c0_20 = arith.constant 0 : index
    %c0_21 = arith.constant 0 : index
    %36 = vector.load %arg8[%c0_20, %c0_21] : memref<16x32xf32, #tpu.memory_space<vmem>>, vector<16x32xf32>
    tpu.vector_store %arg8[%c0_20, %c0_21], %35 {strides = array<i32>} : memref<16x32xf32, #tpu.memory_space<vmem>>, vector<16x32xf32>,
    return
  }
  func.func @transform_0(%arg0: i32) -> (i32, i32) {
    %c0_i32 = arith.constant 0 : i32
    %c0_i32_0 = arith.constant 0 : i32
    return %arg0, %c0_i32 : i32, i32
  }
  func.func @transform_1(%arg0: i32) -> (i32, i32) {
    %c0_i32 = arith.constant 0 : i32
    %c0_i32_0 = arith.constant 0 : i32
    %c0_i32_1 = arith.constant 0 : i32
    return %c0_i32, %c0_i32_0 : i32, i32
  }
  func.func @transform_2(%arg0: i32) -> (i32, i32) {
    %c0_i32 = arith.constant 0 : i32
    %c0_i32_0 = arith.constant 0 : i32
    %c0_i32_1 = arith.constant 0 : i32
    return %c0_i32, %c0_i32_0 : i32, i32
  }
  func.func @transform_3(%arg0: i32) -> (i32, i32) {
    %c0_i32 = arith.constant 0 : i32
    %c0_i32_0 = arith.constant 0 : i32
    %c0_i32_1 = arith.constant 0 : i32
    return %c0_i32, %c0_i32_0 : i32, i32
  }
  func.func @transform_4(%arg0: i32) -> (i32, i32) {
    %c0_i32 = arith.constant 0 : i32
    %c0_i32_0 = arith.constant 0 : i32
    %c0_i32_1 = arith.constant 0 : i32
    return %c0_i32, %c0_i32_0 : i32, i32
  }
  func.func @transform_5(%arg0: i32) -> (i32, i32) {
    %c0_i32 = arith.constant 0 : i32
    %c0_i32_0 = arith.constant 0 : i32
    %c0_i32_1 = arith.constant 0 : i32
    return %c0_i32, %c0_i32_0 : i32, i32
  }
  func.func @transform_6(%arg0: i32) -> (i32, i32) {
    %c0_i32 = arith.constant 0 : i32
    %c0_i32_0 = arith.constant 0 : i32
    %c0_i32_1 = arith.constant 0 : i32
    return %c0_i32, %c0_i32_0 : i32, i32
  }
  func.func @transform_7(%arg0: i32) -> (i32, i32) {
    %c0_i32 = arith.constant 0 : i32
    %c0_i32_0 = arith.constant 0 : i32
    return %arg0, %c0_i32 : i32, i32
  }
}

</mosaic_0001>

<llo_original>
// kernel: tpu_custom_call.1
$region0: #{tpu_custom_call.1}
  #allocation0 [shape = 'u32[]', space=smem, size = 0x4, offset = 0x4, fixed_abs, tag = 'smem constant byte address 0x4 - core index']
  #allocation1 [shape = 'u32[144,128]{1,0:T(1,128)}', space=vmem, size = 0x12000, scoped, tag = 'internal scratch']
  %s0 = inlined_call_operand.vmem [shape: f32[16,32], index: 0, kind: input, shape index: {}]
  %s1 = inlined_call_operand.vmem [shape: f32[32,64], index: 1, kind: input, shape index: {}]
  %s2 = inlined_call_operand.vmem [shape: f32[1,64], index: 2, kind: input, shape index: {}]
  %s3 = inlined_call_operand.vmem [shape: f32[64,32], index: 3, kind: input, shape index: {}]
  %s4 = inlined_call_operand.vmem [shape: f32[1,32], index: 4, kind: input, shape index: {}]
  %s5 = inlined_call_operand.vmem [shape: f32[1,32], index: 5, kind: input, shape index: {}]
  %s6 = inlined_call_operand.vmem [shape: f32[1,32], index: 6, kind: input, shape index: {}]
  %s7 = inlined_call_operand.hbm [shape: f32[16,32], index: 7, kind: output, shape index: {}]
  %s8 = sld [smem:[#allocation0]]
  $region38: #{tpu_custom_call.1} parent=0
    _
  %s10 = ssub.s32 1, %s8
  %s11 = scalar_select 0, %s10, %s8
  $region1: #{tpu_custom_call.1} parent=0
    #allocation2 [shape = 'u8[8192]{0}', space=vmem, size = 0x2000, scoped, tag = 'output window, operand 0, single buffered']
    #allocation3 [shape = 's32[1]{0}', space=sflag, size = 0x4, scoped, tag = 'scoped memory for tpu_custom_call.1']
    %12 = vsyncpa [#allocation3], 0
    // Predicated region
    $region2: #{tpu_custom_call.1} parent=1 // pred_check
      _
    $region3: #{tpu_custom_call.1} parent=1 // pred_check_branch
      %14 = sbr.rel (0) target = $region5
    $region4: #{tpu_custom_call.1} parent=1 // pred_region
      _
    $region5: #{tpu_custom_call.1} parent=1 // pred_fallthru
      _
    // Predicated region
    $region6: #{tpu_custom_call.1} parent=1 // pred_check
      _
    $region7: #{tpu_custom_call.1} parent=1 // pred_check_branch
      %16 = sbr.rel (0) target = $region9
    $region8: #{tpu_custom_call.1} parent=1 // pred_region
      _
    $region9: #{tpu_custom_call.1} parent=1 // pred_fallthru
      _
    // Predicated region
    $region10: #{tpu_custom_call.1} parent=1 // pred_check
      _
    $region11: #{tpu_custom_call.1} parent=1 // pred_check_branch
      %18 = sbr.rel (0) target = $region13
    $region12: #{tpu_custom_call.1} parent=1 // pred_region
      _
    $region13: #{tpu_custom_call.1} parent=1 // pred_fallthru
      _
    // Predicated region
    $region14: #{tpu_custom_call.1} parent=1 // pred_check
      _
    $region15: #{tpu_custom_call.1} parent=1 // pred_check_branch
      %20 = sbr.rel (0) target = $region17
    $region16: #{tpu_custom_call.1} parent=1 // pred_region
      _
    $region17: #{tpu_custom_call.1} parent=1 // pred_fallthru
      _
    // Predicated region
    $region18: #{tpu_custom_call.1} parent=1 // pred_check
      _
    $region19: #{tpu_custom_call.1} parent=1 // pred_check_branch
      %22 = sbr.rel (0) target = $region21
    $region20: #{tpu_custom_call.1} parent=1 // pred_region
      _
    $region21: #{tpu_custom_call.1} parent=1 // pred_fallthru
      _
    // Predicated region
    $region22: #{tpu_custom_call.1} parent=1 // pred_check
      _
    $region23: #{tpu_custom_call.1} parent=1 // pred_check_branch
      %24 = sbr.rel (0) target = $region25
    $region24: #{tpu_custom_call.1} parent=1 // pred_region
      _
    $region25: #{tpu_custom_call.1} parent=1 // pred_fallthru
      _
    // Predicated region
    $region26: #{tpu_custom_call.1} parent=1 // pred_check
      _
    $region27: #{tpu_custom_call.1} parent=1 // pred_check_branch
      %26 = sbr.rel (0) target = $region29
    $region28: #{tpu_custom_call.1} parent=1 // pred_region
      _
    $region29: #{tpu_custom_call.1} parent=1 // pred_fallthru
      _
    %v27 = vld [vmem:[%s0] sm:$0xff]
    %v28 = vld [vmem:[%s0 + $0x8] sm:$0xff]
    %v29 = vld [vmem:[%s1] sm:$0xff]
    %v30 = vld [vmem:[%s1 + $0x8] sm:$0xff]
    %v31 = vld [vmem:[%s1 + $0x10] sm:$0xff]
    %v32 = vld [vmem:[%s1 + $0x18] sm:$0xff]
    %v33 = vld [vmem:[%s2] sm:$0x1]
    %v35 = vlaneseq
    %v36 = vshrl.u32 %v35, 7
    %v37 = vsub.s32 0, %v36
    %v38 = vrot.slane %v33, %v37
    %vm40 = vcmask 261120
    %v42 = vsel %vm40, %v27, 0
    %v45 = vsel %vm40, %v28, 0
    %47 = vmatprep.subr.mxu0 0.0
    %48 = vmatpush1.msra.mxu0 %v29
    %49 = vmatprep.subr.mxu0 0.0
    %50 = vmatpush1.msra.mxu0 %v30
    %51 = vmatprep.subr.mxu0 0.0
    %52 = vmatpush1.msra.mxu0 %v31
    %53 = vmatprep.subr.mxu0 0.0
    %54 = vmatpush1.msra.mxu0 %v32
    %55 = vmatprep.subr.mxu0 0.0
    %56 = vmatpush1.msra.mxu0 0.0
    %57 = vmatprep.subr.mxu0 0.0
    %58 = vmatpush1.msra.mxu0 0.0
    %59 = vmatprep.subr.mxu0 0.0
    %60 = vmatpush1.msra.mxu0 0.0
    %61 = vmatprep.subr.mxu0 0.0
    %62 = vmatpush1.msra.mxu0 0.0
    %63 = vmatprep.subr.mxu0 0.0
    %64 = vmatpush1.msra.mxu0 0.0
    %65 = vmatprep.subr.mxu0 0.0
    %66 = vmatpush1.msra.mxu0 0.0
    %67 = vmatprep.subr.mxu0 0.0
    %68 = vmatpush1.msra.mxu0 0.0
    %69 = vmatprep.subr.mxu0 0.0
    %70 = vmatpush1.msra.mxu0 0.0
    %71 = vmatprep.subr.mxu0 0.0
    %72 = vmatpush1.msra.mxu0 0.0
    %73 = vmatprep.subr.mxu0 0.0
    %74 = vmatpush1.msra.mxu0 0.0
    %75 = vmatprep.subr.mxu0 0.0
    %76 = vmatpush1.msra.mxu0 0.0
    %77 = vmatprep.subr.mxu0 0.0
    %78 = vmatpush1.msra.mxu0 0.0
    %79 = vmatprep.subr.mxu0 0.0
    %80 = vmatpush1.msra.mxu0 0.0
    %81 = vmatprep.subr.mxu0 0.0
    %82 = vmatpush1.msra.mxu0 0.0
    %83 = vmatprep.subr.mxu0 0.0
    %84 = vmatpush1.msra.mxu0 0.0
    %85 = vmatprep.subr.mxu0 0.0
    %86 = vmatpush1.msra.mxu0 0.0
    %87 = vmatprep.subr.mxu0 0.0
    %88 = vmatpush1.msra.mxu0 0.0
    %89 = vmatprep.subr.mxu0 0.0
    %90 = vmatpush1.msra.mxu0 0.0
    %91 = vmatprep.subr.mxu0 0.0
    %92 = vmatpush1.msra.mxu0 0.0
    %93 = vmatprep.subr.mxu0 0.0
    %94 = vmatpush1.msra.mxu0 0.0
    %95 = vmatprep.subr.mxu0 0.0
    %96 = vmatpush1.msra.mxu0 0.0
    %97 = vmatprep.subr.mxu0 0.0
    %98 = vmatpush1.msra.mxu0 0.0
    %99 = vmatprep.subr.mxu0 0.0
    %100 = vmatpush1.msra.mxu0 0.0
    %101 = vmatprep.subr.mxu0 0.0
    %102 = vmatpush1.msra.mxu0 0.0
    %103 = vmatprep.subr.mxu0 0.0
    %104 = vmatpush1.msra.mxu0 0.0
    %105 = vmatprep.subr.mxu0 0.0
    %106 = vmatpush1.msra.mxu0 0.0
    %107 = vmatprep.subr.mxu0 0.0
    %108 = vmatpush1.msra.mxu0 0.0
    %109 = vmatprep.subr.mxu0 0.0
    %110 = vmatpush1.msra.mxu0 0.0
    %111 = vmatprep.mubr.f32.mxu0 0.0
    %112 = vmatmul.mubr.f32.gmra.mrb[0].mxu0 %v42
    %v113 = vpop.f32.mrb[0].mxu0
    %v114 = vadd.f32 %v38, %v113
    %v115 = vpop.f32.mrb[0].mxu0
    %116 = vmatprep.mubr.f32.mxu0 0.0
    %117 = vmatmul.mubr.f32.gmra.mrb[0].mxu0 %v45
    %v118 = vpop.f32.mrb[0].mxu0
    %v119 = vadd.f32 %v38, %v118
    %v120 = vpop.f32.mrb[0].mxu0
    %121 = vdwg.mxu0
    %v122 = vmax.f32 %v114, 0.0
    %v123 = vmax.f32 %v119, 0.0
    %v124 = vld [vmem:[%s3] sm:$0xff]
    %v125 = vld [vmem:[%s3 + $0x8] sm:$0xff]
    %v126 = vld [vmem:[%s3 + $0x10] sm:$0xff]
    %v127 = vld [vmem:[%s3 + $0x18] sm:$0xff]
    %v128 = vld [vmem:[%s3 + $0x20] sm:$0xff]
    %v129 = vld [vmem:[%s3 + $0x28] sm:$0xff]
    %v130 = vld [vmem:[%s3 + $0x30] sm:$0xff]
    %v131 = vld [vmem:[%s3 + $0x38] sm:$0xff]
    %v132 = vld [vmem:[%s4] sm:$0x1]
    %v134 = vlaneseq
    %v135 = vshrl.u32 %v134, 7
    %v136 = vsub.s32 0, %v135
    %v137 = vrot.slane %v132, %v136
    %vm139 = vcmask 523264
    %v141 = vsel %vm139, %v122, 0
    %v144 = vsel %vm139, %v123, 0
    %146 = vmatprep.subr.mxu0 0.0
    %147 = vmatpush1.msra.mxu0 %v124
    %148 = vmatprep.subr.mxu0 0.0
    %149 = vmatpush1.msra.mxu0 %v125
    %150 = vmatprep.subr.mxu0 0.0
    %151 = vmatpush1.msra.mxu0 %v126
    %152 = vmatprep.subr.mxu0 0.0
    %153 = vmatpush1.msra.mxu0 %v127
    %154 = vmatprep.subr.mxu0 0.0
    %155 = vmatpush1.msra.mxu0 %v128
    %156 = vmatprep.subr.mxu0 0.0
    %157 = vmatpush1.msra.mxu0 %v129
    %158 = vmatprep.subr.mxu0 0.0
    %159 = vmatpush1.msra.mxu0 %v130
    %160 = vmatprep.subr.mxu0 0.0
    %161 = vmatpush1.msra.mxu0 %v131
    %162 = vmatprep.subr.mxu0 0.0
    %163 = vmatpush1.msra.mxu0 0.0
    %164 = vmatprep.subr.mxu0 0.0
    %165 = vmatpush1.msra.mxu0 0.0
    %166 = vmatprep.subr.mxu0 0.0
    %167 = vmatpush1.msra.mxu0 0.0
    %168 = vmatprep.subr.mxu0 0.0
    %169 = vmatpush1.msra.mxu0 0.0
    %170 = vmatprep.subr.mxu0 0.0
    %171 = vmatpush1.msra.mxu0 0.0
    %172 = vmatprep.subr.mxu0 0.0
    %173 = vmatpush1.msra.mxu0 0.0
    %174 = vmatprep.subr.mxu0 0.0
    %175 = vmatpush1.msra.mxu0 0.0
    %176 = vmatprep.subr.mxu0 0.0
    %177 = vmatpush1.msra.mxu0 0.0
    %178 = vmatprep.subr.mxu0 0.0
    %179 = vmatpush1.msra.mxu0 0.0
    %180 = vmatprep.subr.mxu0 0.0
    %181 = vmatpush1.msra.mxu0 0.0
    %182 = vmatprep.subr.mxu0 0.0
    %183 = vmatpush1.msra.mxu0 0.0
    %184 = vmatprep.subr.mxu0 0.0
    %185 = vmatpush1.msra.mxu0 0.0
    %186 = vmatprep.subr.mxu0 0.0
    %187 = vmatpush1.msra.mxu0 0.0
    %188 = vmatprep.subr.mxu0 0.0
    %189 = vmatpush1.msra.mxu0 0.0
    %190 = vmatprep.subr.mxu0 0.0
    %191 = vmatpush1.msra.mxu0 0.0
    %192 = vmatprep.subr.mxu0 0.0
    %193 = vmatpush1.msra.mxu0 0.0
    %194 = vmatprep.subr.mxu0 0.0
    %195 = vmatpush1.msra.mxu0 0.0
    %196 = vmatprep.subr.mxu0 0.0
    %197 = vmatpush1.msra.mxu0 0.0
    %198 = vmatprep.subr.mxu0 0.0
    %199 = vmatpush1.msra.mxu0 0.0
    %200 = vmatprep.subr.mxu0 0.0
    %201 = vmatpush1.msra.mxu0 0.0
    %202 = vmatprep.subr.mxu0 0.0
    %203 = vmatpush1.msra.mxu0 0.0
    %204 = vmatprep.subr.mxu0 0.0
    %205 = vmatpush1.msra.mxu0 0.0
    %206 = vmatprep.subr.mxu0 0.0
    %207 = vmatpush1.msra.mxu0 0.0
    %208 = vmatprep.subr.mxu0 0.0
    %209 = vmatpush1.msra.mxu0 0.0
    %210 = vmatprep.mubr.f32.mxu0 0.0
    %211 = vmatmul.mubr.f32.gmra.mrb[0].mxu0 %v141
    %v212 = vpop.f32.mrb[0].mxu0
    %v213 = vadd.f32 %v137, %v212
    %v214 = vpop.f32.mrb[0].mxu0
    %215 = vmatprep.mubr.f32.mxu0 0.0
    %216 = vmatmul.mubr.f32.gmra.mrb[0].mxu0 %v144
    %v217 = vpop.f32.mrb[0].mxu0
    %v218 = vadd.f32 %v137, %v217
    %v219 = vpop.f32.mrb[0].mxu0
    %220 = vdwg.mxu0
    %v221 = vadd.f32 %v27, %v213
    %v222 = vadd.f32 %v28, %v218
    %v223 = vsel %vm40, %v221, 0.0
    %224 = vadd.xlane.f32.xlu0 %v223
    %v225 = vpop.xlane.xlu0 %224
    %v226 = vsel %vm40, %v222, 0.0
    %227 = vadd.xlane.f32.xlu0 %v226
    %v228 = vpop.xlane.xlu0 %227
    %v229 = vrcp.pop 32.0
    %v230 = vmul.f32 %v225, %v229
    %v231 = vmul.f32 %v228, %v229
    %v232 = vsub.f32 %v221, %v230
    %v233 = vsub.f32 %v222, %v231
    %v234 = vmul.f32 %v232, %v232
    %v235 = vmul.f32 %v233, %v233
    %v236 = vsel %vm40, %v234, 0.0
    %237 = vadd.xlane.f32.xlu0 %v236
    %v238 = vpop.xlane.xlu0 %237
    %v239 = vsel %vm40, %v235, 0.0
    %240 = vadd.xlane.f32.xlu0 %v239
    %v241 = vpop.xlane.xlu0 %240
    %v242 = vmul.f32 %v238, 0.032258064
    %v243 = vmul.f32 %v241, 0.032258064
    %v244 = vrsqrt.pop %v242
    %v245 = vmul.f32 %v242, %v244
    %vm246 = vcmp.eq.f32.partialorder %v242, inf
    %v247 = vsel %vm246, %v242, %v245
    %vm248 = vcmp.eq.f32.partialorder %v242, 0.0
    %v249 = vand.u32 %v242, 2147483648
    %v250 = vsel %vm248, %v249, %v247
    %v251 = vrsqrt.pop %v243
    %v252 = vmul.f32 %v243, %v251
    %vm253 = vcmp.eq.f32.partialorder %v243, inf
    %v254 = vsel %vm253, %v243, %v252
    %vm255 = vcmp.eq.f32.partialorder %v243, 0.0
    %v256 = vand.u32 %v243, 2147483648
    %v257 = vsel %vm255, %v256, %v254
    %v258 = vadd.f32 %v250, 0.001
    %v259 = vadd.f32 %v257, 0.001
    %v260 = vrcp.pop %v258
    %v261 = vmul.f32 %v232, %v260
    %v262 = vrcp.pop %v259
    %v263 = vmul.f32 %v233, %v262
    %v264 = vld [vmem:[%s5] sm:$0x1]
    %v266 = vlaneseq
    %v267 = vshrl.u32 %v266, 7
    %v268 = vsub.s32 0, %v267
    %v269 = vrot.slane %v264, %v268
    %v271 = vmul.f32 %v261, %v269
    %v272 = vmul.f32 %v263, %v269
    %v273 = vld [vmem:[%s6] sm:$0x1]
    %v275 = vlaneseq
    %v276 = vshrl.u32 %v275, 7
    %v277 = vsub.s32 0, %v276
    %v278 = vrot.slane %v273, %v277
    %v280 = vadd.f32 %v271, %v278
    %v281 = vadd.f32 %v272, %v278
    %282 = vst.msk [vmem:[#allocation2] sm:$0xff] %vm40, %v280
    %283 = vst.msk [vmem:[#allocation2 + $0x8] sm:$0xff] %vm40, %v281
    // Predicated region
    $region30: #{tpu_custom_call.1} parent=1 // pred_check
      _
    $region31: #{tpu_custom_call.1} parent=1 // pred_check_branch
      %285 = sbr.rel (0) target = $region33
    $region32: #{tpu_custom_call.1} parent=1 // pred_region
      %s287 = ssub.s32 256, 256
      %288 = vsyncadd [#allocation3], %s287
      %s289 = sshll.u32 [#allocation2], 4
      %s290 = int_to_ptr.vmem [resolvable:$true] %s289
      %295 = dma.vmem_to_hbm [thread:$0]  %s290, 256, %s7, [#allocation3], 128, 128, 8
    $region33: #{tpu_custom_call.1} parent=1 // pred_fallthru
      _
    // Predicated region
    $region34: #{tpu_custom_call.1} parent=1 // pred_check
      _
    $region35: #{tpu_custom_call.1} parent=1 // pred_check_branch
      %297 = sbr.rel (0) target = $region37
    $region36: #{tpu_custom_call.1} parent=1 // pred_region
      %298 = dma.done [#allocation3], 256
    $region37: #{tpu_custom_call.1} parent=1 // pred_fallthru
      _
    %299 = vsyncpa [#allocation3], 1

</llo_original>
